<compile_context>
chip_gen: v7x
topology: tpu7x:2x2x1
jax: 0.10.0
libtpu: 0.0.40
codegen_flags: <defaults>
</compile_context>

<pallas_src>
import jax
import jax.numpy as jnp
from jax.experimental import pallas as pl
from jax.experimental.pallas import tpu as pltpu  # noqa: F401  (TPU backend)


def conv_gelu_kernel(w_ref, a_ref, b_ref, o_ref):
    # w_ref: (OC, K) weights; a_ref: (K, M) patch columns; b_ref: (OC, 1) bias
    # Single grid step: all operands resident in VMEM; output (OC, M) lane-dense.
    y = jnp.dot(w_ref[...], a_ref[...], preferred_element_type=jnp.float32)
    y = y + b_ref[...]                               # conv output v1, shape (OC, M)
    v2 = y * 2.0
    v5 = jax.scipy.special.erf(y * 2.3284271247461903) + 1.0
    o_ref[...] = (v2 * v5).astype(o_ref.dtype)


@jax.jit
def model_forward(x, w, b):
    """x: (N, C, H, W) f32; w: (OC, C, KH, KW) f32; b: (OC,) f32."""
    N, C, H, W = x.shape
    OC, IC, KH, KW = w.shape
    assert IC == C and H % KH == 0 and W % KW == 0
    OH, OW = H // KH, W // KW
    M = N * OH * OW
    K = C * KH * KW

    # Patchify directly into the (K, M) layout the kernel consumes:
    # (N,C,OH,KH,OW,KW) -> (C,KH,KW,N,OH,OW) -> (K, M).
    # K rows ordered (c, kh, kw) to match w.reshape(OC, K); M columns ordered
    # (n, oh, ow) so the result maps straight back to NCHW.
    patches_t = (
        x.reshape(N, C, OH, KH, OW, KW)
        .transpose(1, 3, 5, 0, 2, 4)
        .reshape(K, M)
    )
    wmat = w.reshape(OC, K)          # (OC, K)
    bvec = b.reshape(OC, 1)          # (OC, 1) — broadcasts along lanes

    out = pl.pallas_call(
        conv_gelu_kernel,
        out_shape=jax.ShapeDtypeStruct((OC, M), jnp.float32),
        grid=(1,),                    # single step: the whole problem fits in VMEM
        in_specs=[
            pl.BlockSpec((OC, K), lambda i: (0, 0)),   # full weight
            pl.BlockSpec((K, M), lambda i: (0, 0)),    # full patch matrix (49, 1024)
            pl.BlockSpec((OC, 1), lambda i: (0, 0)),   # bias
        ],
        out_specs=pl.BlockSpec((OC, M), lambda i: (0, 0)),  # lane-dense output
    )(wmat, patches_t, bvec)

    # (OC, M) = (OC, N*OH*OW); with N=1 this is just a reshape to NCHW.
    return out.reshape(OC, N, OH, OW).transpose(1, 0, 2, 3)


def reference_forward(x, w, b):
    v1 = jax.lax.conv_general_dilated(
        x, w, window_strides=(7, 7), padding="VALID",
        dimension_numbers=("NCHW", "OIHW", "NCHW"),
    ) + b.reshape(1, -1, 1, 1)
    v2 = v1 * 2.0
    v3 = v1 * 2.3284271247461903
    v5 = jax.scipy.special.erf(v3) + 1.0
    return v2 * v5


if __name__ == "__main__":
    key = jax.random.PRNGKey(0)
    kx, kw, kb = jax.random.split(key, 3)

    # Module-implied shapes: input (1, 1, 224, 224), Conv2d(1, 5, 7, stride=7)
    x = jax.random.normal(kx, (1, 1, 224, 224), dtype=jnp.float32)
    fan_in = 1 * 7 * 7
    bound = 1.0 / (fan_in ** 0.5)
    w = jax.random.uniform(kw, (5, 1, 7, 7), jnp.float32, -bound, bound)
    b = jax.random.uniform(kb, (5,), jnp.float32, -bound, bound)

    out = jax.block_until_ready(model_forward(x, w, b))
    ref = jax.block_until_ready(reference_forward(x, w, b))

    assert out.shape == (1, 5, 32, 32), out.shape
    assert jnp.allclose(out, ref, rtol=1e-3, atol=1e-3), float(
        jnp.max(jnp.abs(out - ref))
    )
    print("KERNEL_OK")
</pallas_src>

<mosaic_0001>
module attributes {stable_mosaic.version = 11 : i64} {
  func.func @conv_gelu_kernel(%arg0: i32, %arg1: memref<5x49xf32, #tpu.memory_space<vmem>>, %arg2: memref<49x1024xf32, #tpu.memory_space<vmem>>, %arg3: memref<5x1xf32, #tpu.memory_space<vmem>>, %arg4: memref<5x1024xf32, #tpu.memory_space<vmem>>) attributes {dimension_semantics = [#tpu.dimension_semantics<arbitrary>], iteration_bounds = array<i64: 1>, scalar_prefetch = 0 : i64, scratch_operands = 0 : i64, tpu.core_type = #tpu.core_type<tc>, window_params = [{pipeline_mode = #tpu.pipeline_mode<synchronous>, transform_indices = @transform_0, window_bounds = array<i64: 5, 49>}, {pipeline_mode = #tpu.pipeline_mode<synchronous>, transform_indices = @transform_1, window_bounds = array<i64: 49, 1024>}, {pipeline_mode = #tpu.pipeline_mode<synchronous>, transform_indices = @transform_2, window_bounds = array<i64: 5, 1>}, {pipeline_mode = #tpu.pipeline_mode<synchronous>, transform_indices = @transform_3, window_bounds = array<i64: 5, 1024>}]} {
    %c0 = arith.constant 0 : index
    %c0_0 = arith.constant 0 : index
    %0 = vector.load %arg1[%c0, %c0_0] : memref<5x49xf32, #tpu.memory_space<vmem>>, vector<5x49xf32>
    %c0_1 = arith.constant 0 : index
    %c0_2 = arith.constant 0 : index
    %1 = vector.load %arg2[%c0_1, %c0_2] : memref<49x1024xf32, #tpu.memory_space<vmem>>, vector<49x1024xf32>
    %cst = arith.constant dense<0.000000e+00> : vector<5x1024xf32>
    %2 = tpu.matmul %0, %1, %cst {dimension_numbers = #tpu.dot_dimension_numbers<[1], [0], [0], [1], [0, 0, 1, 1], [], []>} : vector<5x49xf32>, vector<49x1024xf32>, vector<5x1024xf32> -> vector<5x1024xf32>
    %c0_3 = arith.constant 0 : index
    %c0_4 = arith.constant 0 : index
    %3 = vector.load %arg3[%c0_3, %c0_4] : memref<5x1xf32, #tpu.memory_space<vmem>>, vector<5x1xf32>
    %4 = vector.broadcast %3 : vector<5x1xf32> to vector<5x1024xf32>
    %5 = arith.addf %2, %4 : vector<5x1024xf32>
    %cst_5 = arith.constant 2.000000e+00 : f32
    %6 = vector.broadcast %cst_5 : f32 to vector<5x1024xf32>
    %7 = arith.mulf %5, %6 : vector<5x1024xf32>
    %cst_6 = arith.constant 2.32842708 : f32
    %8 = vector.broadcast %cst_6 : f32 to vector<5x1024xf32>
    %9 = arith.mulf %5, %8 : vector<5x1024xf32>
    %10 = math.erf %9 : vector<5x1024xf32>
    %cst_7 = arith.constant 1.000000e+00 : f32
    %11 = vector.broadcast %cst_7 : f32 to vector<5x1024xf32>
    %12 = arith.addf %10, %11 : vector<5x1024xf32>
    %13 = arith.mulf %7, %12 : vector<5x1024xf32>
    %c0_8 = arith.constant 0 : index
    %c0_9 = arith.constant 0 : index
    %14 = vector.load %arg4[%c0_8, %c0_9] : memref<5x1024xf32, #tpu.memory_space<vmem>>, vector<5x1024xf32>
    tpu.vector_store %arg4[%c0_8, %c0_9], %13 {strides = array<i32>} : memref<5x1024xf32, #tpu.memory_space<vmem>>, vector<5x1024xf32>,
    return
  }
  func.func @transform_0(%arg0: i32) -> (i32, i32) {
    %c0_i32 = arith.constant 0 : i32
    %c0_i32_0 = arith.constant 0 : i32
    %c0_i32_1 = arith.constant 0 : i32
    return %c0_i32, %c0_i32_0 : i32, i32
  }
  func.func @transform_1(%arg0: i32) -> (i32, i32) {
    %c0_i32 = arith.constant 0 : i32
    %c0_i32_0 = arith.constant 0 : i32
    %c0_i32_1 = arith.constant 0 : i32
    return %c0_i32, %c0_i32_0 : i32, i32
  }
  func.func @transform_2(%arg0: i32) -> (i32, i32) {
    %c0_i32 = arith.constant 0 : i32
    %c0_i32_0 = arith.constant 0 : i32
    %c0_i32_1 = arith.constant 0 : i32
    return %c0_i32, %c0_i32_0 : i32, i32
  }
  func.func @transform_3(%arg0: i32) -> (i32, i32) {
    %c0_i32 = arith.constant 0 : i32
    %c0_i32_0 = arith.constant 0 : i32
    %c0_i32_1 = arith.constant 0 : i32
    return %c0_i32, %c0_i32_0 : i32, i32
  }
}

</mosaic_0001>

<llo_original>
// kernel: model_forward.1
$region0: #{model_forward.1}
  #allocation0 [shape = 'u32[]', space=smem, size = 0x4, offset = 0x4, fixed_abs, tag = 'smem constant byte address 0x4 - core index']
  #allocation1 [shape = 'u32[144,128]{1,0:T(1,128)}', space=vmem, size = 0x12000, scoped, tag = 'internal scratch']
  %s0 = inlined_call_operand.vmem [shape: f32[5,49], index: 0, kind: input, shape index: {}]
  %s1 = inlined_call_operand.vmem [shape: f32[49,1024], index: 1, kind: input, shape index: {}]
  %s2 = inlined_call_operand.vmem [shape: f32[5,1], index: 2, kind: input, shape index: {}]
  %s3 = inlined_call_operand.vmem [shape: f32[5,1024], index: 3, kind: output, shape index: {}]
  %s4 = sld [smem:[#allocation0]]
  $region22: #{model_forward.1} parent=0
    _
  %s6 = ssub.s32 1, %s4
  %s7 = scalar_select 0, %s6, %s4
  // Predicated region
  $region2: #{model_forward.1} parent=0 // pred_check
    _
  $region3: #{model_forward.1} parent=0 // pred_check_branch
    %9 = sbr.rel (0) target = $region5
  $region4: #{model_forward.1} parent=0 // pred_region
    _
  $region5: #{model_forward.1} parent=0 // pred_fallthru
    _
  // Predicated region
  $region6: #{model_forward.1} parent=0 // pred_check
    _
  $region7: #{model_forward.1} parent=0 // pred_check_branch
    %11 = sbr.rel (0) target = $region9
  $region8: #{model_forward.1} parent=0 // pred_region
    _
  $region9: #{model_forward.1} parent=0 // pred_fallthru
    _
  // Predicated region
  $region10: #{model_forward.1} parent=0 // pred_check
    _
  $region11: #{model_forward.1} parent=0 // pred_check_branch
    %13 = sbr.rel (0) target = $region13
  $region12: #{model_forward.1} parent=0 // pred_region
    _
  $region13: #{model_forward.1} parent=0 // pred_fallthru
    _
  %v14 = vld [vmem:[%s0] sm:$0x1f]
  %v15 = vld [vmem:[%s1] sm:$0xff]
  %v16 = vld [vmem:[%s1 + $0x8] sm:$0xff]
  %v17 = vld [vmem:[%s1 + $0x10] sm:$0xff]
  %v18 = vld [vmem:[%s1 + $0x18] sm:$0xff]
  %v19 = vld [vmem:[%s1 + $0x20] sm:$0xff]
  %v20 = vld [vmem:[%s1 + $0x28] sm:$0xff]
  %v21 = vld [vmem:[%s1 + $0x30] sm:$0xff]
  %v22 = vld [vmem:[%s1 + $0x38] sm:$0xff]
  %v23 = vld [vmem:[%s1 + $0x40] sm:$0xff]
  %v24 = vld [vmem:[%s1 + $0x48] sm:$0xff]
  %v25 = vld [vmem:[%s1 + $0x50] sm:$0xff]
  %v26 = vld [vmem:[%s1 + $0x58] sm:$0xff]
  %v27 = vld [vmem:[%s1 + $0x60] sm:$0xff]
  %v28 = vld [vmem:[%s1 + $0x68] sm:$0xff]
  %v29 = vld [vmem:[%s1 + $0x70] sm:$0xff]
  %v30 = vld [vmem:[%s1 + $0x78] sm:$0xff]
  %v31 = vld [vmem:[%s1 + $0x80] sm:$0xff]
  %v32 = vld [vmem:[%s1 + $0x88] sm:$0xff]
  %v33 = vld [vmem:[%s1 + $0x90] sm:$0xff]
  %v34 = vld [vmem:[%s1 + $0x98] sm:$0xff]
  %v35 = vld [vmem:[%s1 + $0xa0] sm:$0xff]
  %v36 = vld [vmem:[%s1 + $0xa8] sm:$0xff]
  %v37 = vld [vmem:[%s1 + $0xb0] sm:$0xff]
  %v38 = vld [vmem:[%s1 + $0xb8] sm:$0xff]
  %v39 = vld [vmem:[%s1 + $0xc0] sm:$0xff]
  %v40 = vld [vmem:[%s1 + $0xc8] sm:$0xff]
  %v41 = vld [vmem:[%s1 + $0xd0] sm:$0xff]
  %v42 = vld [vmem:[%s1 + $0xd8] sm:$0xff]
  %v43 = vld [vmem:[%s1 + $0xe0] sm:$0xff]
  %v44 = vld [vmem:[%s1 + $0xe8] sm:$0xff]
  %v45 = vld [vmem:[%s1 + $0xf0] sm:$0xff]
  %v46 = vld [vmem:[%s1 + $0xf8] sm:$0xff]
  %v47 = vld [vmem:[%s1 + $0x100] sm:$0xff]
  %v48 = vld [vmem:[%s1 + $0x108] sm:$0xff]
  %v49 = vld [vmem:[%s1 + $0x110] sm:$0xff]
  %v50 = vld [vmem:[%s1 + $0x118] sm:$0xff]
  %v51 = vld [vmem:[%s1 + $0x120] sm:$0xff]
  %v52 = vld [vmem:[%s1 + $0x128] sm:$0xff]
  %v53 = vld [vmem:[%s1 + $0x130] sm:$0xff]
  %v54 = vld [vmem:[%s1 + $0x138] sm:$0xff]
  %v55 = vld [vmem:[%s1 + $0x140] sm:$0xff]
  %v56 = vld [vmem:[%s1 + $0x148] sm:$0xff]
  %v57 = vld [vmem:[%s1 + $0x150] sm:$0xff]
  %v58 = vld [vmem:[%s1 + $0x158] sm:$0xff]
  %v59 = vld [vmem:[%s1 + $0x160] sm:$0xff]
  %v60 = vld [vmem:[%s1 + $0x168] sm:$0xff]
  %v61 = vld [vmem:[%s1 + $0x170] sm:$0xff]
  %v62 = vld [vmem:[%s1 + $0x178] sm:$0xff]
  %v63 = vld [vmem:[%s1 + $0x180] sm:$0x1]
  %v64 = vld [vmem:[%s1 + $0x188] sm:$0x1]
  %v65 = vld [vmem:[%s1 + $0x190] sm:$0x1]
  %v66 = vld [vmem:[%s1 + $0x198] sm:$0x1]
  %v67 = vld [vmem:[%s1 + $0x1a0] sm:$0x1]
  %v68 = vld [vmem:[%s1 + $0x1a8] sm:$0x1]
  %v69 = vld [vmem:[%s1 + $0x1b0] sm:$0x1]
  %v70 = vld [vmem:[%s1 + $0x1b8] sm:$0x1]
  %v71 = vld [vmem:[%s2] sm:$0x1f]
  %73 = vset.pattern.permute.xlu0 0
  %74 = vperm.xlu0 %73, %v71
  %v75 = vpop.permute.xlu0 %74
  %vm77 = vcmask 400384
  %v79 = vsel %vm77, %v14, 0
  %vm81 = vcmask 1040384
  %v83 = vsel %vm81, %v63, 0
  %v86 = vsel %vm81, %v64, 0
  %v89 = vsel %vm81, %v65, 0
  %v92 = vsel %vm81, %v66, 0
  %v95 = vsel %vm81, %v67, 0
  %v98 = vsel %vm81, %v68, 0
  %v101 = vsel %vm81, %v69, 0
  %v104 = vsel %vm81, %v70, 0
  %106 = vmatprep.subr.mxu0 %v16
  %107 = vmatpush1.msra.mxu0 %v15
  %108 = vmatprep.subr.mxu0 %v24
  %109 = vmatpush1.msra.mxu0 %v23
  %110 = vmatprep.subr.mxu0 %v32
  %111 = vmatpush1.msra.mxu0 %v31
  %112 = vmatprep.subr.mxu0 %v40
  %113 = vmatpush1.msra.mxu0 %v39
  %114 = vmatprep.subr.mxu0 %v48
  %115 = vmatpush1.msra.mxu0 %v47
  %116 = vmatprep.subr.mxu0 %v56
  %117 = vmatpush1.msra.mxu0 %v55
  %118 = vmatprep.subr.mxu0 %v86
  %119 = vmatpush1.msra.mxu0 %v83
  %120 = vmatprep.subr.mxu0 0.0
  %121 = vmatpush1.msra.mxu0 0.0
  %122 = vmatprep.subr.mxu0 0.0
  %123 = vmatpush1.msra.mxu0 0.0
  %124 = vmatprep.subr.mxu0 0.0
  %125 = vmatpush1.msra.mxu0 0.0
  %126 = vmatprep.subr.mxu0 0.0
  %127 = vmatpush1.msra.mxu0 0.0
  %128 = vmatprep.subr.mxu0 0.0
  %129 = vmatpush1.msra.mxu0 0.0
  %130 = vmatprep.subr.mxu0 0.0
  %131 = vmatpush1.msra.mxu0 0.0
  %132 = vmatprep.subr.mxu0 0.0
  %133 = vmatpush1.msra.mxu0 0.0
  %134 = vmatprep.subr.mxu0 0.0
  %135 = vmatpush1.msra.mxu0 0.0
  %136 = vmatprep.subr.mxu0 0.0
  %137 = vmatpush1.msra.mxu0 0.0
  %138 = vmatprep.subr.mxu0 0.0
  %139 = vmatpush1.msra.mxu0 0.0
  %140 = vmatprep.subr.mxu0 0.0
  %141 = vmatpush1.msra.mxu0 0.0
  %142 = vmatprep.subr.mxu0 0.0
  %143 = vmatpush1.msra.mxu0 0.0
  %144 = vmatprep.subr.mxu0 0.0
  %145 = vmatpush1.msra.mxu0 0.0
  %146 = vmatprep.subr.mxu0 0.0
  %147 = vmatpush1.msra.mxu0 0.0
  %148 = vmatprep.subr.mxu0 0.0
  %149 = vmatpush1.msra.mxu0 0.0
  %150 = vmatprep.subr.mxu0 0.0
  %151 = vmatpush1.msra.mxu0 0.0
  %152 = vmatprep.subr.mxu0 0.0
  %153 = vmatpush1.msra.mxu0 0.0
  %154 = vmatprep.subr.mxu0 0.0
  %155 = vmatpush1.msra.mxu0 0.0
  %156 = vmatprep.subr.mxu0 0.0
  %157 = vmatpush1.msra.mxu0 0.0
  %158 = vmatprep.subr.mxu0 0.0
  %159 = vmatpush1.msra.mxu0 0.0
  %160 = vmatprep.subr.mxu0 0.0
  %161 = vmatpush1.msra.mxu0 0.0
  %162 = vmatprep.subr.mxu0 0.0
  %163 = vmatpush1.msra.mxu0 0.0
  %164 = vmatprep.subr.mxu0 0.0
  %165 = vmatpush1.msra.mxu0 0.0
  %166 = vmatprep.subr.mxu0 0.0
  %167 = vmatpush1.msra.mxu0 0.0
  %168 = vmatprep.subr.mxu0 0.0
  %169 = vmatpush1.msra.mxu0 0.0
  %170 = vmatprep.mubr.f32.mxu0 0.0
  %171 = vmatmul.mubr.f32.gmra.mrb[0].mxu0 %v79
  %v172 = vpop.f32.mrb[0].mxu0
  %v173 = vadd.f32 %v75, %v172
  %v174 = vpop.f32.mrb[0].mxu0
  %v175 = vadd.f32 %v75, %v174
  %176 = vdwg.mxu0
  %177 = vmatprep.subr.mxu0 %v18
  %178 = vmatpush1.msra.mxu0 %v17
  %179 = vmatprep.subr.mxu0 %v26
  %180 = vmatpush1.msra.mxu0 %v25
  %181 = vmatprep.subr.mxu0 %v34
  %182 = vmatpush1.msra.mxu0 %v33
  %183 = vmatprep.subr.mxu0 %v42
  %184 = vmatpush1.msra.mxu0 %v41
  %185 = vmatprep.subr.mxu0 %v50
  %186 = vmatpush1.msra.mxu0 %v49
  %187 = vmatprep.subr.mxu0 %v58
  %188 = vmatpush1.msra.mxu0 %v57
  %189 = vmatprep.subr.mxu0 %v92
  %190 = vmatpush1.msra.mxu0 %v89
  %191 = vmatprep.subr.mxu0 0.0
  %192 = vmatpush1.msra.mxu0 0.0
  %193 = vmatprep.subr.mxu0 0.0
  %194 = vmatpush1.msra.mxu0 0.0
  %195 = vmatprep.subr.mxu0 0.0
  %196 = vmatpush1.msra.mxu0 0.0
  %197 = vmatprep.subr.mxu0 0.0
  %198 = vmatpush1.msra.mxu0 0.0
  %199 = vmatprep.subr.mxu0 0.0
  %200 = vmatpush1.msra.mxu0 0.0
  %201 = vmatprep.subr.mxu0 0.0
  %202 = vmatpush1.msra.mxu0 0.0
  %203 = vmatprep.subr.mxu0 0.0
  %204 = vmatpush1.msra.mxu0 0.0
  %205 = vmatprep.subr.mxu0 0.0
  %206 = vmatpush1.msra.mxu0 0.0
  %207 = vmatprep.subr.mxu0 0.0
  %208 = vmatpush1.msra.mxu0 0.0
  %209 = vmatprep.subr.mxu0 0.0
  %210 = vmatpush1.msra.mxu0 0.0
  %211 = vmatprep.subr.mxu0 0.0
  %212 = vmatpush1.msra.mxu0 0.0
  %213 = vmatprep.subr.mxu0 0.0
  %214 = vmatpush1.msra.mxu0 0.0
  %215 = vmatprep.subr.mxu0 0.0
  %216 = vmatpush1.msra.mxu0 0.0
  %217 = vmatprep.subr.mxu0 0.0
  %218 = vmatpush1.msra.mxu0 0.0
  %219 = vmatprep.subr.mxu0 0.0
  %220 = vmatpush1.msra.mxu0 0.0
  %221 = vmatprep.subr.mxu0 0.0
  %222 = vmatpush1.msra.mxu0 0.0
  %223 = vmatprep.subr.mxu0 0.0
  %224 = vmatpush1.msra.mxu0 0.0
  %225 = vmatprep.subr.mxu0 0.0
  %226 = vmatpush1.msra.mxu0 0.0
  %227 = vmatprep.subr.mxu0 0.0
  %228 = vmatpush1.msra.mxu0 0.0
  %229 = vmatprep.subr.mxu0 0.0
  %230 = vmatpush1.msra.mxu0 0.0
  %231 = vmatprep.subr.mxu0 0.0
  %232 = vmatpush1.msra.mxu0 0.0
  %233 = vmatprep.subr.mxu0 0.0
  %234 = vmatpush1.msra.mxu0 0.0
  %235 = vmatprep.subr.mxu0 0.0
  %236 = vmatpush1.msra.mxu0 0.0
  %237 = vmatprep.subr.mxu0 0.0
  %238 = vmatpush1.msra.mxu0 0.0
  %239 = vmatprep.subr.mxu0 0.0
  %240 = vmatpush1.msra.mxu0 0.0
  %241 = vmatprep.mubr.f32.mxu0 0.0
  %242 = vmatmul.mubr.f32.gmra.mrb[0].mxu0 %v79
  %v243 = vpop.f32.mrb[0].mxu0
  %v244 = vadd.f32 %v75, %v243
  %v245 = vpop.f32.mrb[0].mxu0
  %v246 = vadd.f32 %v75, %v245
  %247 = vdwg.mxu0
  %248 = vmatprep.subr.mxu0 %v20
  %249 = vmatpush1.msra.mxu0 %v19
  %250 = vmatprep.subr.mxu0 %v28
  %251 = vmatpush1.msra.mxu0 %v27
  %252 = vmatprep.subr.mxu0 %v36
  %253 = vmatpush1.msra.mxu0 %v35
  %254 = vmatprep.subr.mxu0 %v44
  %255 = vmatpush1.msra.mxu0 %v43
  %256 = vmatprep.subr.mxu0 %v52
  %257 = vmatpush1.msra.mxu0 %v51
  %258 = vmatprep.subr.mxu0 %v60
  %259 = vmatpush1.msra.mxu0 %v59
  %260 = vmatprep.subr.mxu0 %v98
  %261 = vmatpush1.msra.mxu0 %v95
  %262 = vmatprep.subr.mxu0 0.0
  %263 = vmatpush1.msra.mxu0 0.0
  %264 = vmatprep.subr.mxu0 0.0
  %265 = vmatpush1.msra.mxu0 0.0
  %266 = vmatprep.subr.mxu0 0.0
  %267 = vmatpush1.msra.mxu0 0.0
  %268 = vmatprep.subr.mxu0 0.0
  %269 = vmatpush1.msra.mxu0 0.0
  %270 = vmatprep.subr.mxu0 0.0
  %271 = vmatpush1.msra.mxu0 0.0
  %272 = vmatprep.subr.mxu0 0.0
  %273 = vmatpush1.msra.mxu0 0.0
  %274 = vmatprep.subr.mxu0 0.0
  %275 = vmatpush1.msra.mxu0 0.0
  %276 = vmatprep.subr.mxu0 0.0
  %277 = vmatpush1.msra.mxu0 0.0
  %278 = vmatprep.subr.mxu0 0.0
  %279 = vmatpush1.msra.mxu0 0.0
  %280 = vmatprep.subr.mxu0 0.0
  %281 = vmatpush1.msra.mxu0 0.0
  %282 = vmatprep.subr.mxu0 0.0
  %283 = vmatpush1.msra.mxu0 0.0
  %284 = vmatprep.subr.mxu0 0.0
  %285 = vmatpush1.msra.mxu0 0.0
  %286 = vmatprep.subr.mxu0 0.0
  %287 = vmatpush1.msra.mxu0 0.0
  %288 = vmatprep.subr.mxu0 0.0
  %289 = vmatpush1.msra.mxu0 0.0
  %290 = vmatprep.subr.mxu0 0.0
  %291 = vmatpush1.msra.mxu0 0.0
  %292 = vmatprep.subr.mxu0 0.0
  %293 = vmatpush1.msra.mxu0 0.0
  %294 = vmatprep.subr.mxu0 0.0
  %295 = vmatpush1.msra.mxu0 0.0
  %296 = vmatprep.subr.mxu0 0.0
  %297 = vmatpush1.msra.mxu0 0.0
  %298 = vmatprep.subr.mxu0 0.0
  %299 = vmatpush1.msra.mxu0 0.0
  %300 = vmatprep.subr.mxu0 0.0
  %301 = vmatpush1.msra.mxu0 0.0
  %302 = vmatprep.subr.mxu0 0.0
  %303 = vmatpush1.msra.mxu0 0.0
  %304 = vmatprep.subr.mxu0 0.0
  %305 = vmatpush1.msra.mxu0 0.0
  %306 = vmatprep.subr.mxu0 0.0
  %307 = vmatpush1.msra.mxu0 0.0
  %308 = vmatprep.subr.mxu0 0.0
  %309 = vmatpush1.msra.mxu0 0.0
  %310 = vmatprep.subr.mxu0 0.0
  %311 = vmatpush1.msra.mxu0 0.0
  %312 = vmatprep.mubr.f32.mxu0 0.0
  %313 = vmatmul.mubr.f32.gmra.mrb[0].mxu0 %v79
  %v314 = vpop.f32.mrb[0].mxu0
  %v315 = vadd.f32 %v75, %v314
  %v316 = vpop.f32.mrb[0].mxu0
  %v317 = vadd.f32 %v75, %v316
  %318 = vdwg.mxu0
  %319 = vmatprep.subr.mxu0 %v22
  %320 = vmatpush1.msra.mxu0 %v21
  %321 = vmatprep.subr.mxu0 %v30
  %322 = vmatpush1.msra.mxu0 %v29
  %323 = vmatprep.subr.mxu0 %v38
  %324 = vmatpush1.msra.mxu0 %v37
  %325 = vmatprep.subr.mxu0 %v46
  %326 = vmatpush1.msra.mxu0 %v45
  %327 = vmatprep.subr.mxu0 %v54
  %328 = vmatpush1.msra.mxu0 %v53
  %329 = vmatprep.subr.mxu0 %v62
  %330 = vmatpush1.msra.mxu0 %v61
  %331 = vmatprep.subr.mxu0 %v104
  %332 = vmatpush1.msra.mxu0 %v101
  %333 = vmatprep.subr.mxu0 0.0
  %334 = vmatpush1.msra.mxu0 0.0
  %335 = vmatprep.subr.mxu0 0.0
  %336 = vmatpush1.msra.mxu0 0.0
  %337 = vmatprep.subr.mxu0 0.0
  %338 = vmatpush1.msra.mxu0 0.0
  %339 = vmatprep.subr.mxu0 0.0
  %340 = vmatpush1.msra.mxu0 0.0
  %341 = vmatprep.subr.mxu0 0.0
  %342 = vmatpush1.msra.mxu0 0.0
  %343 = vmatprep.subr.mxu0 0.0
  %344 = vmatpush1.msra.mxu0 0.0
  %345 = vmatprep.subr.mxu0 0.0
  %346 = vmatpush1.msra.mxu0 0.0
  %347 = vmatprep.subr.mxu0 0.0
  %348 = vmatpush1.msra.mxu0 0.0
  %349 = vmatprep.subr.mxu0 0.0
  %350 = vmatpush1.msra.mxu0 0.0
  %351 = vmatprep.subr.mxu0 0.0
  %352 = vmatpush1.msra.mxu0 0.0
  %353 = vmatprep.subr.mxu0 0.0
  %354 = vmatpush1.msra.mxu0 0.0
  %355 = vmatprep.subr.mxu0 0.0
  %356 = vmatpush1.msra.mxu0 0.0
  %357 = vmatprep.subr.mxu0 0.0
  %358 = vmatpush1.msra.mxu0 0.0
  %359 = vmatprep.subr.mxu0 0.0
  %360 = vmatpush1.msra.mxu0 0.0
  %361 = vmatprep.subr.mxu0 0.0
  %362 = vmatpush1.msra.mxu0 0.0
  %363 = vmatprep.subr.mxu0 0.0
  %364 = vmatpush1.msra.mxu0 0.0
  %365 = vmatprep.subr.mxu0 0.0
  %366 = vmatpush1.msra.mxu0 0.0
  %367 = vmatprep.subr.mxu0 0.0
  %368 = vmatpush1.msra.mxu0 0.0
  %369 = vmatprep.subr.mxu0 0.0
  %370 = vmatpush1.msra.mxu0 0.0
  %371 = vmatprep.subr.mxu0 0.0
  %372 = vmatpush1.msra.mxu0 0.0
  %373 = vmatprep.subr.mxu0 0.0
  %374 = vmatpush1.msra.mxu0 0.0
  %375 = vmatprep.subr.mxu0 0.0
  %376 = vmatpush1.msra.mxu0 0.0
  %377 = vmatprep.subr.mxu0 0.0
  %378 = vmatpush1.msra.mxu0 0.0
  %379 = vmatprep.subr.mxu0 0.0
  %380 = vmatpush1.msra.mxu0 0.0
  %381 = vmatprep.subr.mxu0 0.0
  %382 = vmatpush1.msra.mxu0 0.0
  %383 = vmatprep.mubr.f32.mxu0 0.0
  %384 = vmatmul.mubr.f32.gmra.mrb[0].mxu0 %v79
  %v385 = vpop.f32.mrb[0].mxu0
  %v386 = vadd.f32 %v75, %v385
  %v387 = vpop.f32.mrb[0].mxu0
  %v388 = vadd.f32 %v75, %v387
  %389 = vdwg.mxu0
  %v390 = vmul.f32 %v173, 2.0
  %v391 = vmul.f32 %v175, 2.0
  %v392 = vmul.f32 %v244, 2.0
  %v393 = vmul.f32 %v246, 2.0
  %v394 = vmul.f32 %v315, 2.0
  %v395 = vmul.f32 %v317, 2.0
  %v396 = vmul.f32 %v386, 2.0
  %v397 = vmul.f32 %v388, 2.0
  %v398 = vmul.f32 %v173, 2.328427
  %v399 = vmul.f32 %v175, 2.328427
  %v400 = vmul.f32 %v244, 2.328427
  %v401 = vmul.f32 %v246, 2.328427
  %v402 = vmul.f32 %v315, 2.328427
  %v403 = vmul.f32 %v317, 2.328427
  %v404 = vmul.f32 %v386, 2.328427
  %v405 = vmul.f32 %v388, 2.328427
  %v406 = verf.f32.pop %v398
  %v407 = verf.f32.pop %v399
  %v408 = verf.f32.pop %v400
  %v409 = verf.f32.pop %v401
  %v410 = verf.f32.pop %v402
  %v411 = verf.f32.pop %v403
  %v412 = verf.f32.pop %v404
  %v413 = verf.f32.pop %v405
  %v414 = vadd.f32 %v406, 1.0
  %v415 = vadd.f32 %v407, 1.0
  %v416 = vadd.f32 %v408, 1.0
  %v417 = vadd.f32 %v409, 1.0
  %v418 = vadd.f32 %v410, 1.0
  %v419 = vadd.f32 %v411, 1.0
  %v420 = vadd.f32 %v412, 1.0
  %v421 = vadd.f32 %v413, 1.0
  %v422 = vmul.f32 %v390, %v414
  %v423 = vmul.f32 %v391, %v415
  %v424 = vmul.f32 %v392, %v416
  %v425 = vmul.f32 %v393, %v417
  %v426 = vmul.f32 %v394, %v418
  %v427 = vmul.f32 %v395, %v419
  %v428 = vmul.f32 %v396, %v420
  %v429 = vmul.f32 %v397, %v421
  %430 = vst [vmem:[%s3] sm:$0x1f] %v422
  %431 = vst [vmem:[%s3 + $0x8] sm:$0x1f] %v423
  %432 = vst [vmem:[%s3 + $0x10] sm:$0x1f] %v424
  %433 = vst [vmem:[%s3 + $0x18] sm:$0x1f] %v425
  %434 = vst [vmem:[%s3 + $0x20] sm:$0x1f] %v426
  %435 = vst [vmem:[%s3 + $0x28] sm:$0x1f] %v427
  %436 = vst [vmem:[%s3 + $0x30] sm:$0x1f] %v428
  %437 = vst [vmem:[%s3 + $0x38] sm:$0x1f] %v429
  // Predicated region
  $region14: #{model_forward.1} parent=0 // pred_check
    _
  $region15: #{model_forward.1} parent=0 // pred_check_branch
    %439 = sbr.rel (0) target = $region17
  $region16: #{model_forward.1} parent=0 // pred_region
    _
  $region17: #{model_forward.1} parent=0 // pred_fallthru
    _
  // Predicated region
  $region18: #{model_forward.1} parent=0 // pred_check
    _
  $region19: #{model_forward.1} parent=0 // pred_check_branch
    %441 = sbr.rel (0) target = $region21
  $region20: #{model_forward.1} parent=0 // pred_region
    _
  $region21: #{model_forward.1} parent=0 // pred_fallthru
    _

</llo_original>
